<compile_context>
chip_gen: v7x
topology: tpu7x:2x2x1
jax: 0.10.0
libtpu: 0.0.40
codegen_flags: <defaults>
</compile_context>

<pallas_src>
import functools

import jax
import jax.numpy as jnp
from jax.experimental import pallas as pl
from jax.experimental.pallas import tpu as pltpu


def _round_up(x, m):
    return ((x + m - 1) // m) * m


def _choose_tile_n(n, c, itemsize):
    """Pick a sublane tile so 2 buffers x tile stay a few MiB (v7x-safe)."""
    mult = 8 if itemsize >= 4 else 16          # bf16 packs 16 rows per vreg
    target_bytes = 4 * 1024 * 1024             # ~4 MiB per logits buffer
    t = target_bytes // max(1, c * itemsize)
    t = max(mult, min(1024, (t // mult) * mult))
    return min(t, _round_up(n, mult))


def _pow_static(x, gamma):
    """x ** gamma with a static exponent: multiply chain for small integers."""
    g = float(gamma)
    if g.is_integer() and 0 <= g <= 16:
        gi = int(g)
        if gi == 0:
            return jnp.ones_like(x)
        result = None
        base = x
        e = gi
        while e > 0:
            if e & 1:
                result = base if result is None else result * base
            e >>= 1
            if e:
                base = base * base
        return result
    return jnp.power(x, jnp.float32(g))


def _focal_loss_kernel(logits_ref, targets_ref, *rest,
                       gamma, n_valid, tile_n, has_alpha, need_mask):
    if has_alpha:
        alpha_ref, out_ref = rest
    else:
        (out_ref,) = rest

    logits = logits_ref[...].astype(jnp.float32)            # (T, C)
    tgt = targets_ref[...]                                   # (T, 1) int32
    t, c = logits.shape

    # --- per-sample cross entropy (log-softmax gather via one-hot) ---
    m = jnp.max(logits, axis=-1, keepdims=True)              # (T, 1)
    z = logits - m                                            # (T, C)
    lse = jnp.log(jnp.sum(jnp.exp(z), axis=-1, keepdims=True))  # (T, 1)
    class_idx = jax.lax.broadcasted_iota(jnp.int32, (t, c), 1)  # (T, C)
    onehot = (class_idx == tgt).astype(jnp.float32)           # (T, C)
    tgt_logit = jnp.sum(onehot * z, axis=-1, keepdims=True)   # (T, 1)
    ce = lse - tgt_logit                                      # (T, 1)

    # --- optional alpha weighting: alpha[targets[i]] (matches torch module:
    #     bce = bce * alpha_w, then pt = exp(-bce)) ---
    if has_alpha:
        alpha = alpha_ref[...].astype(jnp.float32)            # (1, C)
        alpha_w = jnp.sum(onehot * alpha, axis=-1, keepdims=True)
        ce = ce * alpha_w

    # --- focal modulation ---
    pt = jnp.exp(-ce)
    base = jnp.maximum(1.0 - pt, 0.0)      # clamp: pt may round slightly > 1
    focal = _pow_static(base, gamma) * ce  # (T, 1)

    # mask padded rows (only emitted when N was padded up to a tile multiple)
    if need_mask:
        row = pl.program_id(0) * tile_n + jax.lax.broadcasted_iota(
            jnp.int32, (t, 1), 0)
        focal = jnp.where(row < n_valid, focal, 0.0)

    tile_sum = jnp.sum(focal)
    # lane-dense writeback: fill the whole (1, 8, 128) output block.
    out_ref[...] = jnp.broadcast_to(tile_sum, out_ref.shape).astype(jnp.float32)


def focal_loss(inputs, targets, alpha=None, gamma=5.0):
    """Pallas equivalent of FocalLoss.forward.

    inputs : (N, C) logits (any float dtype; DMA'd as-is, upcast in-kernel)
    targets: (N,)   int class labels
    alpha  : optional length-C per-class weight (list / array) or None
    gamma  : focusing parameter (static)
    """
    n, c = inputs.shape
    itemsize = jnp.dtype(inputs.dtype).itemsize
    tile_n = _choose_tile_n(n, c, itemsize)
    n_pad = _round_up(n, tile_n)
    num_tiles = n_pad // tile_n
    need_mask = n_pad != n

    logits = inputs
    targets2d = targets.astype(jnp.int32).reshape(n, 1)
    if need_mask:
        logits = jnp.pad(logits, ((0, n_pad - n), (0, 0)))
        targets2d = jnp.pad(targets2d, ((0, n_pad - n), (0, 0)))

    has_alpha = alpha is not None
    operands = [logits, targets2d]
    in_specs = [
        pl.BlockSpec((tile_n, c), lambda i: (i, 0)),   # logits tile
        pl.BlockSpec((tile_n, 1), lambda i: (i, 0)),   # targets tile
    ]
    if has_alpha:
        alpha_row = jnp.asarray(alpha, dtype=jnp.float32).reshape(1, c)
        operands.append(alpha_row)
        in_specs.append(pl.BlockSpec((1, c), lambda i: (0, 0)))  # resident row

    kernel = functools.partial(
        _focal_loss_kernel,
        gamma=float(gamma),
        n_valid=n,
        tile_n=tile_n,
        has_alpha=has_alpha,
        need_mask=need_mask,
    )

    # VMEM budget: double-buffered logits tile (+f32 temps) with headroom,
    # capped below the v7x 64 MiB physical limit.
    tile_bytes_f32 = tile_n * c * 4
    vmem_limit = int(min(48 * 1024 * 1024,
                         max(16 * 1024 * 1024, 8 * tile_bytes_f32)))

    partials = pl.pallas_call(
        kernel,
        out_shape=jax.ShapeDtypeStruct((num_tiles, 8, 128), jnp.float32),
        grid=(num_tiles,),
        in_specs=in_specs,
        out_specs=pl.BlockSpec((1, 8, 128), lambda i: (i, 0, 0)),
        compiler_params=pltpu.CompilerParams(
            dimension_semantics=("parallel",),
            vmem_limit_bytes=vmem_limit,
        ),
    )(*operands)

    # one scalar per tile lives (replicated) in each output block; take lane 0.
    return jnp.sum(partials[:, 0, 0]) / jnp.float32(n)


def _reference(inputs, targets, alpha=None, gamma=5.0):
    # Pure-JAX reference mirroring torch.nn.CrossEntropyLoss(reduction='none')
    # followed by the focal modulation of the PyTorch module.
    logits = inputs.astype(jnp.float32)
    logp = jax.nn.log_softmax(logits, axis=-1)
    ce = -jnp.take_along_axis(logp, targets[:, None].astype(jnp.int32), axis=-1)[:, 0]
    if alpha is not None:
        ce = ce * jnp.asarray(alpha, jnp.float32)[targets]
    pt = jnp.exp(-ce)
    return jnp.mean((1.0 - pt) ** gamma * ce)


if __name__ == "__main__":
    key = jax.random.PRNGKey(0)
    k1, k2, k3, k4 = jax.random.split(key, 4)

    # Case 1: module defaults (alpha=None, gamma=5.0), tiny shapes.
    N, C = 8, 32
    logits = jax.random.normal(k1, (N, C), dtype=jnp.float32)
    targets = jax.random.randint(k2, (N,), 0, C, dtype=jnp.int32)
    loss = jax.block_until_ready(focal_loss(logits, targets, alpha=None, gamma=5.0))
    ref = _reference(logits, targets, alpha=None, gamma=5.0)
    assert jnp.allclose(loss, ref, rtol=1e-5, atol=1e-5), (loss, ref)

    # Case 2: alpha weights + N not a multiple of the tile (padding/mask path).
    N2, C2 = 37, 32
    logits2 = jax.random.normal(k3, (N2, C2), dtype=jnp.float32)
    targets2 = jax.random.randint(k4, (N2,), 0, C2, dtype=jnp.int32)
    alpha = jnp.linspace(0.5, 1.5, C2)
    loss_a = jax.block_until_ready(focal_loss(logits2, targets2, alpha=alpha, gamma=5.0))
    ref_a = _reference(logits2, targets2, alpha=alpha, gamma=5.0)
    assert jnp.allclose(loss_a, ref_a, rtol=1e-5, atol=1e-5), (loss_a, ref_a)

    print("KERNEL_OK")
</pallas_src>

<mosaic_0001>
module attributes {stable_mosaic.version = 11 : i64} {
  func.func @_focal_loss_kernel(%arg0: i32, %arg1: memref<8x32xf32, #tpu.memory_space<vmem>>, %arg2: memref<8x1xi32, #tpu.memory_space<vmem>>, %arg3: memref<1x8x128xf32, #tpu.memory_space<vmem>>) attributes {dimension_semantics = [#tpu.dimension_semantics<parallel>], iteration_bounds = array<i64: 1>, scalar_prefetch = 0 : i64, scratch_operands = 0 : i64, tpu.core_type = #tpu.core_type<tc>, window_params = [{transform_indices = @transform_0, window_bounds = array<i64: 8, 32>}, {transform_indices = @transform_1, window_bounds = array<i64: 8, 1>}, {transform_indices = @transform_2, window_bounds = array<i64: 1, 8, 128>}]} {
    %c0 = arith.constant 0 : index
    %c0_0 = arith.constant 0 : index
    %0 = vector.load %arg1[%c0, %c0_0] : memref<8x32xf32, #tpu.memory_space<vmem>>, vector<8x32xf32>
    %c0_1 = arith.constant 0 : index
    %c0_2 = arith.constant 0 : index
    %1 = vector.load %arg2[%c0_1, %c0_2] : memref<8x1xi32, #tpu.memory_space<vmem>>, vector<8x1xi32>
    %cst = arith.constant dense<0xFF800000> : vector<8xf32>
    %2 = vector.multi_reduction <maximumf>, %0, %cst [1] : vector<8x32xf32> to vector<8xf32>
    %3 = vector.shape_cast %2 : vector<8xf32> to vector<8x1xf32>
    %4 = vector.broadcast %3 : vector<8x1xf32> to vector<8x32xf32>
    %5 = arith.subf %0, %4 : vector<8x32xf32>
    %6 = math.exp %5 : vector<8x32xf32>
    %cst_3 = arith.constant dense<0.000000e+00> : vector<8xf32>
    %7 = vector.multi_reduction <add>, %6, %cst_3 [1] : vector<8x32xf32> to vector<8xf32>
    %8 = vector.shape_cast %7 : vector<8xf32> to vector<8x1xf32>
    %9 = math.log %8 : vector<8x1xf32>
    %10 = tpu.iota {dimensions = array<i32: 1>} : vector<8x32xi32>
    %11 = vector.broadcast %1 : vector<8x1xi32> to vector<8x32xi32>
    %12 = arith.cmpi eq, %10, %11 : vector<8x32xi32>
    %13 = arith.extui %12 : vector<8x32xi1> to vector<8x32xi32>
    %14 = arith.sitofp %13 : vector<8x32xi32> to vector<8x32xf32>
    %15 = arith.mulf %14, %5 : vector<8x32xf32>
    %cst_4 = arith.constant dense<0.000000e+00> : vector<8xf32>
    %16 = vector.multi_reduction <add>, %15, %cst_4 [1] : vector<8x32xf32> to vector<8xf32>
    %17 = vector.shape_cast %16 : vector<8xf32> to vector<8x1xf32>
    %18 = arith.subf %9, %17 : vector<8x1xf32>
    %cst_5 = arith.constant 0.000000e+00 : f32
    %19 = vector.broadcast %cst_5 : f32 to vector<8x1xf32>
    %20 = arith.subf %19, %18 : vector<8x1xf32>
    %21 = math.exp %20 : vector<8x1xf32>
    %cst_6 = arith.constant 1.000000e+00 : f32
    %22 = vector.broadcast %cst_6 : f32 to vector<8x1xf32>
    %23 = arith.subf %22, %21 : vector<8x1xf32>
    %cst_7 = arith.constant 0.000000e+00 : f32
    %24 = vector.broadcast %cst_7 : f32 to vector<8x1xf32>
    %25 = arith.maximumf %23, %24 : vector<8x1xf32>
    %26 = arith.mulf %25, %25 : vector<8x1xf32>
    %27 = arith.mulf %26, %26 : vector<8x1xf32>
    %28 = arith.mulf %25, %27 : vector<8x1xf32>
    %29 = arith.mulf %28, %18 : vector<8x1xf32>
    %30 = vector.shape_cast %29 : vector<8x1xf32> to vector<1x8x1xf32>
    %cst_8 = arith.constant dense<0.000000e+00> : vector<1xf32>
    %31 = vector.multi_reduction <add>, %30, %cst_8 [1, 2] : vector<1x8x1xf32> to vector<1xf32>
    %32 = vector.shape_cast %31 : vector<1xf32> to vector<1x1x1xf32>
    %33 = vector.extract %32[0, 0, 0] : f32 from vector<1x1x1xf32>
    %34 = vector.broadcast %33 : f32 to vector<1x8x128xf32>
    %c0_9 = arith.constant 0 : index
    %c0_10 = arith.constant 0 : index
    %c0_11 = arith.constant 0 : index
    %35 = vector.load %arg3[%c0_9, %c0_10, %c0_11] : memref<1x8x128xf32, #tpu.memory_space<vmem>>, vector<1x8x128xf32>
    tpu.vector_store %arg3[%c0_9, %c0_10, %c0_11], %34 {strides = array<i32>} : memref<1x8x128xf32, #tpu.memory_space<vmem>>, vector<1x8x128xf32>,
    return
  }
  func.func @transform_0(%arg0: i32) -> (i32, i32) {
    %c0_i32 = arith.constant 0 : i32
    %c0_i32_0 = arith.constant 0 : i32
    return %arg0, %c0_i32 : i32, i32
  }
  func.func @transform_1(%arg0: i32) -> (i32, i32) {
    %c0_i32 = arith.constant 0 : i32
    %c0_i32_0 = arith.constant 0 : i32
    return %arg0, %c0_i32 : i32, i32
  }
  func.func @transform_2(%arg0: i32) -> (i32, i32, i32) {
    %c0_i32 = arith.constant 0 : i32
    %c0_i32_0 = arith.constant 0 : i32
    %c0_i32_1 = arith.constant 0 : i32
    return %arg0, %c0_i32, %c0_i32_0 : i32, i32, i32
  }
}

</mosaic_0001>

<llo_original>
// kernel: tpu_custom_call.1
$region0: #{tpu_custom_call.1}
  #allocation0 [shape = 'u32[]', space=smem, size = 0x4, offset = 0x4, fixed_abs, tag = 'smem constant byte address 0x4 - core index']
  #allocation1 [shape = 'u32[144,128]{1,0:T(1,128)}', space=vmem, size = 0x12000, scoped, tag = 'internal scratch']
  %s0 = inlined_call_operand.vmem [shape: f32[8,32], index: 0, kind: input, shape index: {}]
  %s1 = inlined_call_operand.vmem [shape: s32[8,1], index: 1, kind: input, shape index: {}]
  %s2 = inlined_call_operand.hbm [shape: f32[1,8,128], index: 2, kind: output, shape index: {}]
  %s3 = sld [smem:[#allocation0]]
  $region18: #{tpu_custom_call.1} parent=0
    _
  %s5 = ssub.s32 1, %s3
  %s6 = scalar_select 0, %s5, %s3
  $region1: #{tpu_custom_call.1} parent=0
    #allocation2 [shape = 'u8[4096]{0}', space=vmem, size = 0x1000, scoped, tag = 'output window, operand 0, single buffered']
    #allocation3 [shape = 's32[1]{0}', space=sflag, size = 0x4, scoped, tag = 'scoped memory for tpu_custom_call.1']
    %7 = vsyncpa [#allocation3], 0
    // Predicated region
    $region2: #{tpu_custom_call.1} parent=1 // pred_check
      _
    $region3: #{tpu_custom_call.1} parent=1 // pred_check_branch
      %9 = sbr.rel (0) target = $region5
    $region4: #{tpu_custom_call.1} parent=1 // pred_region
      _
    $region5: #{tpu_custom_call.1} parent=1 // pred_fallthru
      _
    // Predicated region
    $region6: #{tpu_custom_call.1} parent=1 // pred_check
      _
    $region7: #{tpu_custom_call.1} parent=1 // pred_check_branch
      %11 = sbr.rel (0) target = $region9
    $region8: #{tpu_custom_call.1} parent=1 // pred_region
      _
    $region9: #{tpu_custom_call.1} parent=1 // pred_fallthru
      _
    %v12 = vld [vmem:[%s0] sm:$0xff]
    %v13 = vld [vmem:[%s1] sm:$0xff]
    %vm14 = vcmask 261120
    %v15 = vsel %vm14, %v12, -inf
    %16 = vmax.xlane.f32.xlu0 %v15
    %v17 = vpop.xlane.xlu0 %16
    %v18 = vsub.f32 %v12, %v17
    %v19 = vmul.f32 %v18, 1.442695
    %v20 = vpow.pop %v19
    %v21 = vsel %vm14, %v20, 0.0
    %22 = vadd.xlane.f32.xlu0 %v21
    %v23 = vpop.xlane.xlu0 %22
    %v24 = vlog2.pop %v23
    %v25 = vmul.f32 %v24, 0.6931472
    %v26 = vlaneseq
    %v27 = vand.u32 %v26, 127
    %28 = vset.pattern.permute.xlu0 0
    %29 = vperm.xlu0 %28, %v13
    %v30 = vpop.permute.xlu0 %29
    %vm31 = vcmp.eq.s32.totalorder %v27, %v30
    %v32 = vsel %vm31, 1, 0
    %v33 = vcvt.s32.f32 %v32
    %v34 = vmul.f32 %v33, %v18
    %v35 = vsel %vm14, %v34, 0.0
    %36 = vadd.xlane.f32.xlu0 %v35
    %v37 = vpop.xlane.xlu0 %36
    %v38 = vsub.f32 %v25, %v37
    %v39 = vsub.f32 0.0, %v38
    %v40 = vmul.f32 %v39, 1.442695
    %v41 = vpow.pop %v40
    %v42 = vsub.f32 1.0, %v41
    %v43 = vmax.f32 %v42, 0.0
    %v44 = vmul.f32 %v43, %v43
    %v45 = vmul.f32 %v44, %v44
    %v46 = vmul.f32 %v43, %v45
    %v47 = vmul.f32 %v46, %v38
    %vm48 = vcmask 7168
    %v49 = vsel %vm48, %v47, 0.0
    %50 = vadd.xlane.f32.xlu0 %v49
    %v51 = vpop.xlane.xlu0 %50
    %v52 = vrot.slane %v51, 4
    %v53 = vadd.f32 %v51, %v52
    %v54 = vrot.slane %v53, 2
    %v55 = vadd.f32 %v53, %v54
    %v56 = vrot.slane %v55, 1
    %v57 = vadd.f32 %v55, %v56
    %s58 = vtos %v57
    %v59 = vstv %s58
    %60 = vst [vmem:[#allocation2] sm:$0xff] %v59
    // Predicated region
    $region10: #{tpu_custom_call.1} parent=1 // pred_check
      _
    $region11: #{tpu_custom_call.1} parent=1 // pred_check_branch
      %62 = sbr.rel (0) target = $region13
    $region12: #{tpu_custom_call.1} parent=1 // pred_region
      %s64 = ssub.s32 128, 128
      %65 = vsyncadd [#allocation3], %s64
      %s67 = sshll.u32 [#allocation2], 4
      %s68 = int_to_ptr.vmem [resolvable:$true] %s67
      %70 = dma.vmem_to_hbm [thread:$0]  %s68, 128, %s2, [#allocation3]
    $region13: #{tpu_custom_call.1} parent=1 // pred_fallthru
      _
    // Predicated region
    $region14: #{tpu_custom_call.1} parent=1 // pred_check
      _
    $region15: #{tpu_custom_call.1} parent=1 // pred_check_branch
      %72 = sbr.rel (0) target = $region17
    $region16: #{tpu_custom_call.1} parent=1 // pred_region
      %73 = dma.done [#allocation3], 128
    $region17: #{tpu_custom_call.1} parent=1 // pred_fallthru
      _
    %74 = vsyncpa [#allocation3], 1

</llo_original>
